<compile_context>
chip_gen: v5e
topology: v5e:2x2
jax: 0.10.0
libtpu: 0.0.40
codegen_flags: <defaults>
</compile_context>

<pallas_src>
import functools

import jax
import jax.numpy as jnp
from jax import lax
from jax.experimental import pallas as pl
from jax.experimental.pallas import tpu as pltpu

LANES = 128
SUBLANES = 8


def _default_num_cores():
    # 2 TensorCores per chip on v7x; 1 on v5e/v6e.  Detection failure -> 1
    # (always correct, just single-core).
    try:
        kind = jax.devices()[0].device_kind.lower()
    except Exception:  # pragma: no cover - defensive
        return 1
    return 2 if "v7" in kind else 1


def _wbce_kernel(threshold, rows, tile_rows, steps_per_core, needs_mask,
                 re_ref, gt_ref, acc_ref):
    i = pl.program_id(1)

    @pl.when(i == 0)
    def _():
        acc_ref[...] = jnp.zeros_like(acc_ref)

    re = re_ref[...].astype(jnp.float32)
    gt = gt_ref[...].astype(jnp.float32)

    if needs_mask:
        # Only emitted when a block can over-read past `rows` (ragged tail or
        # ragged per-core step split).  Garbage rows become (re=0, gt=0),
        # which contribute exactly 0 to all three sums (the -100 log clamp
        # turns 0*log(0) into 0*(-100) = 0).
        c = pl.program_id(0)
        abs_step = c * steps_per_core + i
        row_ids = lax.broadcasted_iota(jnp.int32, (tile_rows, LANES), 0)
        valid = (abs_step * tile_rows + row_ids) < rows
        re = jnp.where(valid, re, 0.0)
        gt = jnp.where(valid, gt, 0.0)

    pos = (gt > threshold).astype(jnp.float32)

    # F.binary_cross_entropy clamps the log terms at -100 (PyTorch semantics).
    log_re = jnp.maximum(jnp.log(re), -100.0)
    log_1m = jnp.maximum(jnp.log(1.0 - re), -100.0)
    # Un-negated BCE, factored to save VPU ops:
    #   -bce = gt*log_re + (1-gt)*log_1m = gt*(log_re - log_1m) + log_1m
    nbce = gt * (log_re - log_1m) + log_1m

    def vsum(x):  # (tile_rows, LANES) -> (SUBLANES, LANES); VPU-only adds
        return jnp.sum(x.reshape(tile_rows // SUBLANES, SUBLANES, LANES),
                       axis=0)

    acc_ref[0] += vsum(pos)          # S_pos partial
    acc_ref[1] += vsum(nbce * pos)   # -S_bce_pos partial
    acc_ref[2] += vsum(nbce)         # -S_bce_total partial


def _partial_sums_xla(re, gt, threshold):
    """Tiny XLA fallback for the <align-element remainder (same math)."""
    re = re.astype(jnp.float32)
    gt = gt.astype(jnp.float32)
    pos = (gt > threshold).astype(jnp.float32)
    log_re = jnp.maximum(jnp.log(re), -100.0)
    log_1m = jnp.maximum(jnp.log(1.0 - re), -100.0)
    nbce = gt * (log_re - log_1m) + log_1m
    return jnp.stack([pos.sum(), (nbce * pos).sum(), nbce.sum()])


def weighted_bce_loss(re, gt, threshold=0.5, max_tile_rows=8192,
                      num_cores=None):
    assert re.shape == gt.shape
    n = re.size
    if num_cores is None:
        num_cores = _default_num_cores()

    re_flat = re.reshape(-1)
    gt_flat = gt.reshape(-1)

    # Row alignment adapts to input packing: 8 sublanes for 32-bit, 16 for
    # 16-bit (bf16), 32 for 8-bit — keeps block shapes on native tiles.
    def _row_align(dt):
        return SUBLANES * max(1, 4 // jnp.dtype(dt).itemsize)
    row_align = max(_row_align(re.dtype), _row_align(gt.dtype))
    align = row_align * LANES

    # Largest aligned prefix goes through the kernel (free reshape, no pad
    # copy); the tiny remainder (< align elements) is reduced in plain XLA.
    n_main = (n // align) * align

    sums = jnp.zeros((3,), jnp.float32)

    if n_main:
        re_main = re_flat if n_main == n else re_flat[:n_main]
        gt_main = gt_flat if n_main == n else gt_flat[:n_main]
        rows = n_main // LANES                 # multiple of row_align
        re2 = re_main.reshape(rows, LANES)     # free row-major view
        gt2 = gt_main.reshape(rows, LANES)

        # --- tile_rows: prefer the largest aligned divisor of rows (no mask);
        #     fall back to a masked max-size tile only if divisors are tiny.
        max_tr = max(row_align, (max_tile_rows // row_align) * row_align)
        base = rows // row_align
        best = row_align
        for d in range(min(max_tr // row_align, base), 0, -1):
            if base % d == 0:
                best = d * row_align
                break
        if rows <= max_tr or best >= max_tr // 8:
            tile_rows = best
        else:
            tile_rows = max_tr

        num_row_blocks = pl.cdiv(rows, tile_rows)
        num_cores_eff = num_cores if num_row_blocks >= num_cores else 1
        steps_per_core = pl.cdiv(num_row_blocks, num_cores_eff)
        needs_clamp = num_cores_eff * steps_per_core > num_row_blocks
        needs_mask = (rows % tile_rows != 0) or needs_clamp

        if needs_clamp:
            def in_map(c, i):
                return (jnp.minimum(c * steps_per_core + i,
                                    num_row_blocks - 1), 0)
        else:
            def in_map(c, i):
                return (c * steps_per_core + i, 0)

        tile_spec = pl.BlockSpec((tile_rows, LANES), in_map)
        # Per-core resident accumulator block: constant index along the
        # "arbitrary" axis, distinct block per core along the "parallel" axis.
        out_spec = pl.BlockSpec((None, 3, SUBLANES, LANES),
                                lambda c, i: (c, 0, 0, 0))

        kernel = functools.partial(_wbce_kernel, float(threshold), rows,
                                   tile_rows, steps_per_core, needs_mask)

        in_itemsize = max(re2.dtype.itemsize, gt2.dtype.itemsize)
        vmem_need = (2 * 2 * tile_rows * LANES * in_itemsize
                     + 2 * 3 * SUBLANES * LANES * 4)
        vmem_limit = int(min(100 * 2**20, max(32 * 2**20,
                                              vmem_need + 4 * 2**20)))

        cost = pl.CostEstimate(
            flops=int(12 * n_main),
            transcendentals=int(2 * n_main),
            bytes_accessed=int(n_main * (re2.dtype.itemsize
                                         + gt2.dtype.itemsize)
                               + num_cores_eff * 3 * SUBLANES * LANES * 4),
        )

        partials = pl.pallas_call(
            kernel,
            out_shape=jax.ShapeDtypeStruct(
                (num_cores_eff, 3, SUBLANES, LANES), jnp.float32),
            grid_spec=pltpu.PrefetchScalarGridSpec(
                num_scalar_prefetch=0,
                grid=(num_cores_eff, steps_per_core),
                in_specs=[tile_spec, tile_spec],
                out_specs=out_spec,
            ),
            compiler_params=pltpu.CompilerParams(
                dimension_semantics=("parallel", "arbitrary"),
                vmem_limit_bytes=vmem_limit),
            cost_estimate=cost,
        )(re2, gt2)

        sums = jnp.sum(partials, axis=(0, 2, 3))   # tiny reduce outside

    if n_main < n:
        sums = sums + _partial_sums_xla(re_flat[n_main:], gt_flat[n_main:],
                                        threshold)

    s_pos = sums[0]
    s_bce_pos = -sums[1]
    s_bce_tot = -sums[2]

    s_neg = jnp.float32(n) - s_pos
    s_bce_neg = s_bce_tot - s_bce_pos

    # mask = w1*pos + w0*neg, w1 = s_neg, w0 = s_pos; sum(mask) = 2*s_pos*s_neg
    numer = s_neg * s_bce_pos + s_pos * s_bce_neg
    denom = 2.0 * s_pos * s_neg
    return numer / denom


def _reference_loss(re, gt, threshold=0.5):
    re = re.astype(jnp.float32)
    gt = gt.astype(jnp.float32)
    neg = (gt <= threshold).astype(jnp.float32)
    pos = (gt > threshold).astype(jnp.float32)
    weight_1 = neg.sum()
    weight_0 = pos.sum()
    mask = weight_1 * pos + weight_0 * neg
    bce = -(gt * jnp.maximum(jnp.log(re), -100.0)
            + (1.0 - gt) * jnp.maximum(jnp.log(1.0 - re), -100.0))
    return (bce * mask).sum() / mask.sum()


if __name__ == "__main__":
    key = jax.random.PRNGKey(0)
    k1, k2, k3, k4 = jax.random.split(key, 4)

    # NCHW inputs, as the PyTorch module would receive (predictions in (0,1)).
    shape = (2, 4, 16, 16)
    re = jax.nn.sigmoid(jax.random.normal(k1, shape, dtype=jnp.float32))
    gt = jax.random.uniform(k2, shape, dtype=jnp.float32)

    loss = jax.block_until_ready(weighted_bce_loss(re, gt, threshold=0.5))
    ref = jax.block_until_ready(_reference_loss(re, gt, threshold=0.5))
    assert jnp.allclose(loss, ref, rtol=1e-5, atol=1e-5), (loss, ref)

    # Ragged element count: aligned prefix through the kernel + XLA tail.
    shape2 = (1, 3, 23, 31)   # 2139 elems -> 2048-elem kernel prefix + 91 tail
    re_r = jax.nn.sigmoid(jax.random.normal(k3, shape2, dtype=jnp.float32))
    gt_r = jax.random.uniform(k4, shape2, dtype=jnp.float32)
    loss_r = jax.block_until_ready(weighted_bce_loss(re_r, gt_r, threshold=0.5))
    ref_r = jax.block_until_ready(_reference_loss(re_r, gt_r, threshold=0.5))
    assert jnp.allclose(loss_r, ref_r, rtol=1e-5, atol=1e-5), (loss_r, ref_r)

    print("KERNEL_OK")
</pallas_src>

<mosaic_0001>
module attributes {stable_mosaic.version = 11 : i64} {
  func.func @_wbce_kernel(%arg0: i32, %arg1: i32, %arg2: memref<16x128xf32, #tpu.memory_space<vmem>>, %arg3: memref<16x128xf32, #tpu.memory_space<vmem>>, %arg4: memref<1x3x8x128xf32, #tpu.memory_space<vmem>>) attributes {dimension_semantics = [#tpu.dimension_semantics<parallel>, #tpu.dimension_semantics<arbitrary>], iteration_bounds = array<i64: 1, 1>, scalar_prefetch = 0 : i64, scratch_operands = 0 : i64, tpu.core_type = #tpu.core_type<tc>, window_params = [{transform_indices = @transform_0, window_bounds = array<i64: 16, 128>}, {transform_indices = @transform_1, window_bounds = array<i64: 16, 128>}, {transform_indices = @transform_2, window_bounds = array<i64: 1, 3, 8, 128>}]} {
    %c0_i32 = arith.constant 0 : i32
    %0 = arith.cmpi eq, %arg1, %c0_i32 : i32
    %1 = arith.extui %0 : i1 to i32
    %c0_i32_0 = arith.constant 0 : i32
    %2 = arith.cmpi ne, %1, %c0_i32_0 : i32
    scf.if %2 {
      %cst_32 = arith.constant 0.000000e+00 : f32
      %45 = vector.broadcast %cst_32 : f32 to vector<3x8x128xf32>
      %c0_33 = arith.constant 0 : index
      %c0_34 = arith.constant 0 : index
      %c0_35 = arith.constant 0 : index
      %c0_36 = arith.constant 0 : index
      %46 = vector.load %arg4[%c0_33, %c0_34, %c0_35, %c0_36] : memref<1x3x8x128xf32, #tpu.memory_space<vmem>>, vector<1x3x8x128xf32>
      %47 = vector.shape_cast %46 : vector<1x3x8x128xf32> to vector<3x8x128xf32>
      %48 = vector.shape_cast %45 : vector<3x8x128xf32> to vector<1x3x8x128xf32>
      tpu.vector_store %arg4[%c0_33, %c0_34, %c0_35, %c0_36], %48 {strides = array<i32>} : memref<1x3x8x128xf32, #tpu.memory_space<vmem>>, vector<1x3x8x128xf32>,
    } else {
    }
    %c0 = arith.constant 0 : index
    %c0_1 = arith.constant 0 : index
    %3 = vector.load %arg2[%c0, %c0_1] : memref<16x128xf32, #tpu.memory_space<vmem>>, vector<16x128xf32>
    %c0_2 = arith.constant 0 : index
    %c0_3 = arith.constant 0 : index
    %4 = vector.load %arg3[%c0_2, %c0_3] : memref<16x128xf32, #tpu.memory_space<vmem>>, vector<16x128xf32>
    %cst = arith.constant 5.000000e-01 : f32
    %5 = vector.broadcast %cst : f32 to vector<16x128xf32>
    %6 = arith.cmpf ogt, %4, %5 : vector<16x128xf32>
    %7 = arith.extui %6 : vector<16x128xi1> to vector<16x128xi32>
    %8 = arith.sitofp %7 : vector<16x128xi32> to vector<16x128xf32>
    %9 = math.log %3 : vector<16x128xf32>
    %cst_4 = arith.constant -1.000000e+02 : f32
    %10 = vector.broadcast %cst_4 : f32 to vector<16x128xf32>
    %11 = arith.maximumf %9, %10 : vector<16x128xf32>
    %cst_5 = arith.constant 1.000000e+00 : f32
    %12 = vector.broadcast %cst_5 : f32 to vector<16x128xf32>
    %13 = arith.subf %12, %3 : vector<16x128xf32>
    %14 = math.log %13 : vector<16x128xf32>
    %cst_6 = arith.constant -1.000000e+02 : f32
    %15 = vector.broadcast %cst_6 : f32 to vector<16x128xf32>
    %16 = arith.maximumf %14, %15 : vector<16x128xf32>
    %17 = arith.subf %11, %16 : vector<16x128xf32>
    %18 = arith.mulf %4, %17 : vector<16x128xf32>
    %19 = arith.addf %18, %16 : vector<16x128xf32>
    %c0_7 = arith.constant 0 : index
    %c0_8 = arith.constant 0 : index
    %c0_9 = arith.constant 0 : index
    %c0_10 = arith.constant 0 : index
    %20 = vector.load %arg4[%c0_7, %c0_8, %c0_9, %c0_10] : memref<1x3x8x128xf32, #tpu.memory_space<vmem>>, vector<1x1x8x128xf32>
    %21 = vector.shape_cast %20 : vector<1x1x8x128xf32> to vector<8x128xf32>
    %22 = vector.shape_cast %8 : vector<16x128xf32> to vector<2x8x128xf32>
    %cst_11 = arith.constant dense<0.000000e+00> : vector<8x128xf32>
    %23 = vector.multi_reduction <add>, %22, %cst_11 [0] : vector<2x8x128xf32> to vector<8x128xf32>
    %24 = arith.addf %21, %23 : vector<8x128xf32>
    %c0_12 = arith.constant 0 : index
    %c0_13 = arith.constant 0 : index
    %c0_14 = arith.constant 0 : index
    %c0_15 = arith.constant 0 : index
    %25 = vector.load %arg4[%c0_12, %c0_13, %c0_14, %c0_15] : memref<1x3x8x128xf32, #tpu.memory_space<vmem>>, vector<1x1x8x128xf32>
    %26 = vector.shape_cast %25 : vector<1x1x8x128xf32> to vector<8x128xf32>
    %27 = vector.shape_cast %24 : vector<8x128xf32> to vector<1x1x8x128xf32>
    tpu.vector_store %arg4[%c0_12, %c0_13, %c0_14, %c0_15], %27 {strides = array<i32>} : memref<1x3x8x128xf32, #tpu.memory_space<vmem>>, vector<1x1x8x128xf32>,
    %c0_16 = arith.constant 0 : index
    %c1 = arith.constant 1 : index
    %c0_17 = arith.constant 0 : index
    %c0_18 = arith.constant 0 : index
    %28 = vector.load %arg4[%c0_16, %c1, %c0_17, %c0_18] : memref<1x3x8x128xf32, #tpu.memory_space<vmem>>, vector<1x1x8x128xf32>
    %29 = vector.shape_cast %28 : vector<1x1x8x128xf32> to vector<8x128xf32>
    %30 = arith.mulf %19, %8 : vector<16x128xf32>
    %31 = vector.shape_cast %30 : vector<16x128xf32> to vector<2x8x128xf32>
    %cst_19 = arith.constant dense<0.000000e+00> : vector<8x128xf32>
    %32 = vector.multi_reduction <add>, %31, %cst_19 [0] : vector<2x8x128xf32> to vector<8x128xf32>
    %33 = arith.addf %29, %32 : vector<8x128xf32>
    %c0_20 = arith.constant 0 : index
    %c1_21 = arith.constant 1 : index
    %c0_22 = arith.constant 0 : index
    %c0_23 = arith.constant 0 : index
    %34 = vector.load %arg4[%c0_20, %c1_21, %c0_22, %c0_23] : memref<1x3x8x128xf32, #tpu.memory_space<vmem>>, vector<1x1x8x128xf32>
    %35 = vector.shape_cast %34 : vector<1x1x8x128xf32> to vector<8x128xf32>
    %36 = vector.shape_cast %33 : vector<8x128xf32> to vector<1x1x8x128xf32>
    tpu.vector_store %arg4[%c0_20, %c1_21, %c0_22, %c0_23], %36 {strides = array<i32>} : memref<1x3x8x128xf32, #tpu.memory_space<vmem>>, vector<1x1x8x128xf32>,
    %c0_24 = arith.constant 0 : index
    %c2 = arith.constant 2 : index
    %c0_25 = arith.constant 0 : index
    %c0_26 = arith.constant 0 : index
    %37 = vector.load %arg4[%c0_24, %c2, %c0_25, %c0_26] : memref<1x3x8x128xf32, #tpu.memory_space<vmem>>, vector<1x1x8x128xf32>
    %38 = vector.shape_cast %37 : vector<1x1x8x128xf32> to vector<8x128xf32>
    %39 = vector.shape_cast %19 : vector<16x128xf32> to vector<2x8x128xf32>
    %cst_27 = arith.constant dense<0.000000e+00> : vector<8x128xf32>
    %40 = vector.multi_reduction <add>, %39, %cst_27 [0] : vector<2x8x128xf32> to vector<8x128xf32>
    %41 = arith.addf %38, %40 : vector<8x128xf32>
    %c0_28 = arith.constant 0 : index
    %c2_29 = arith.constant 2 : index
    %c0_30 = arith.constant 0 : index
    %c0_31 = arith.constant 0 : index
    %42 = vector.load %arg4[%c0_28, %c2_29, %c0_30, %c0_31] : memref<1x3x8x128xf32, #tpu.memory_space<vmem>>, vector<1x1x8x128xf32>
    %43 = vector.shape_cast %42 : vector<1x1x8x128xf32> to vector<8x128xf32>
    %44 = vector.shape_cast %41 : vector<8x128xf32> to vector<1x1x8x128xf32>
    tpu.vector_store %arg4[%c0_28, %c2_29, %c0_30, %c0_31], %44 {strides = array<i32>} : memref<1x3x8x128xf32, #tpu.memory_space<vmem>>, vector<1x1x8x128xf32>,
    return
  }
  func.func @transform_0(%arg0: i32, %arg1: i32) -> (i32, i32) {
    %c1_i32 = arith.constant 1 : i32
    %0 = arith.muli %arg0, %c1_i32 : i32
    %1 = arith.addi %0, %arg1 : i32
    %c0_i32 = arith.constant 0 : i32
    %c0_i32_0 = arith.constant 0 : i32
    return %1, %c0_i32 : i32, i32
  }
  func.func @transform_1(%arg0: i32, %arg1: i32) -> (i32, i32) {
    %c1_i32 = arith.constant 1 : i32
    %0 = arith.muli %arg0, %c1_i32 : i32
    %1 = arith.addi %0, %arg1 : i32
    %c0_i32 = arith.constant 0 : i32
    %c0_i32_0 = arith.constant 0 : i32
    return %1, %c0_i32 : i32, i32
  }
  func.func @transform_2(%arg0: i32, %arg1: i32) -> (i32, i32, i32, i32) {
    %c0_i32 = arith.constant 0 : i32
    %c0_i32_0 = arith.constant 0 : i32
    %c0_i32_1 = arith.constant 0 : i32
    %c0_i32_2 = arith.constant 0 : i32
    return %arg0, %c0_i32, %c0_i32_0, %c0_i32_1 : i32, i32, i32, i32
  }
}

</mosaic_0001>

<llo_original>
// kernel: tpu_custom_call.1
$region0: #{tpu_custom_call.1}
  #allocation0 [shape = 'u32[]', space=smem, size = 0x4, offset = 0x4, fixed_abs, tag = 'smem constant byte address 0x4 - core index']
  #allocation1 [shape = 'u32[72,128]{1,0:T(1,128)}', space=vmem, size = 0x9000, scoped, tag = 'internal scratch']
  %s0 = inlined_call_operand.hbm [shape: f32[16,128], index: 0, kind: input, shape index: {}]
  %s1 = inlined_call_operand.hbm [shape: f32[16,128], index: 1, kind: input, shape index: {}]
  %s2 = inlined_call_operand.hbm [shape: f32[1,3,8,128], index: 2, kind: output, shape index: {}]
  %s3 = sld [smem:[#allocation0]]
  $region30: #{tpu_custom_call.1} parent=0
    _
  %s5 = ssub.s32 1, %s3
  %s6 = scalar_select 0, %s5, %s3
  $region1: #{tpu_custom_call.1} parent=0
    #allocation2 [shape = 'u8[8192]{0}', space=vmem, size = 0x2000, scoped, tag = 'input window, operand 0, single buffered']
    #allocation3 [shape = 's32[1]{0}', space=sflag, size = 0x4, scoped, tag = 'scoped memory for tpu_custom_call.1']
    #allocation4 [shape = 's32[1]{0}', space=sflag, size = 0x4, scoped, tag = 'scoped memory for tpu_custom_call.1']
    #allocation5 [shape = 'u8[8192]{0}', space=vmem, size = 0x2000, scoped, tag = 'input window, operand 1, single buffered']
    #allocation6 [shape = 's32[1]{0}', space=sflag, size = 0x4, scoped, tag = 'scoped memory for tpu_custom_call.1']
    #allocation7 [shape = 'u8[12288]{0}', space=vmem, size = 0x3000, scoped, tag = 'output window, operand 0, single buffered']
    %7 = vsyncpa [#allocation3], 0
    %8 = vsyncpa [#allocation6], 0
    %9 = vsyncpa [#allocation4], 0
    // Predicated region
    $region2: #{tpu_custom_call.1} parent=1 // pred_check
      _
    $region3: #{tpu_custom_call.1} parent=1 // pred_check_branch
      %11 = sbr.rel (0) target = $region5
    $region4: #{tpu_custom_call.1} parent=1 // pred_region
      %s12 = sadd.s32 0, 0
      %s13 = smul.u32 2, %s12
      %15 = vsyncadd [#allocation3], 0
      %s16 = smul.addr %s13, 8
      %s17 = scalar_lea.hbm %s0, %s16
      %s18 = sshll.u32 %s17, 4
      %s19 = int_to_ptr.hbm [resolvable:$true] %s18
      %s20 = sshll.u32 [#allocation2], 4
      %s21 = int_to_ptr.vmem [resolvable:$true] %s20
      %26 = dma.hbm_to_vmem [thread:$0]  %s19, 256, %s21, [#allocation3], 128, 128, 8
    $region5: #{tpu_custom_call.1} parent=1 // pred_fallthru
      _
    // Predicated region
    $region6: #{tpu_custom_call.1} parent=1 // pred_check
      _
    $region7: #{tpu_custom_call.1} parent=1 // pred_check_branch
      %28 = sbr.rel (0) target = $region9
    $region8: #{tpu_custom_call.1} parent=1 // pred_region
      %s29 = sadd.s32 0, 0
      %s30 = smul.u32 2, %s29
      %32 = vsyncadd [#allocation6], 0
      %s33 = smul.addr %s30, 8
      %s34 = scalar_lea.hbm %s1, %s33
      %s35 = sshll.u32 %s34, 4
      %s36 = int_to_ptr.hbm [resolvable:$true] %s35
      %s37 = sshll.u32 [#allocation5], 4
      %s38 = int_to_ptr.vmem [resolvable:$true] %s37
      %43 = dma.hbm_to_vmem [thread:$0]  %s36, 256, %s38, [#allocation6], 128, 128, 8
    $region9: #{tpu_custom_call.1} parent=1 // pred_fallthru
      _
    // Predicated region
    $region10: #{tpu_custom_call.1} parent=1 // pred_check
      _
    $region11: #{tpu_custom_call.1} parent=1 // pred_check_branch
      %45 = sbr.rel (0) target = $region13
    $region12: #{tpu_custom_call.1} parent=1 // pred_region
      %47 = dma.done [#allocation3], 256
    $region13: #{tpu_custom_call.1} parent=1 // pred_fallthru
      _
    // Predicated region
    $region14: #{tpu_custom_call.1} parent=1 // pred_check
      _
    $region15: #{tpu_custom_call.1} parent=1 // pred_check_branch
      %49 = sbr.rel (0) target = $region17
    $region16: #{tpu_custom_call.1} parent=1 // pred_region
      %51 = dma.done [#allocation6], 256
    $region17: #{tpu_custom_call.1} parent=1 // pred_fallthru
      _
    %s52 = sadd.s32 0, 0
    %s53 = smul.u32 2, %s52
    %s54 = sadd.s32 0, 0
    %s55 = smul.u32 2, %s54
    %p56 = scmp.eq.s32.totalorder 0, 0
    // Predicated region
    $region18: #{tpu_custom_call.1} parent=1 // pred_check
      %p57 = pneg %p56
    $region19: #{tpu_custom_call.1} parent=1 // pred_check_branch
      %59 = sbr.rel (%p57) target = $region21
    $region20: #{tpu_custom_call.1} parent=1 // pred_region
      %60 = vst [vmem:[#allocation7] sm:$0xff] 0.0
      %61 = vst [vmem:[#allocation7 + $0x8] sm:$0xff] 0.0
      %62 = vst [vmem:[#allocation7 + $0x10] sm:$0xff] 0.0
    $region21: #{tpu_custom_call.1} parent=1 // pred_fallthru
      _
    %v63 = vld [vmem:[#allocation2] sm:$0xff]
    %v64 = vld [vmem:[#allocation2 + $0x8] sm:$0xff]
    %v65 = vld [vmem:[#allocation5] sm:$0xff]
    %v66 = vld [vmem:[#allocation5 + $0x8] sm:$0xff]
    %vm67 = vcmp.gt.f32.partialorder %v65, 0.5
    %vm68 = vcmp.gt.f32.partialorder %v66, 0.5
    %v69 = vsel %vm67, 1, 0
    %v70 = vsel %vm68, 1, 0
    %v71 = vcvt.s32.f32 %v69
    %v72 = vcvt.s32.f32 %v70
    %v73 = vlog2.pop %v63
    %v74 = vmul.f32 %v73, 0.6931472
    %v75 = vlog2.pop %v64
    %v76 = vmul.f32 %v75, 0.6931472
    %v77 = vmax.f32 %v74, -100.0
    %v78 = vmax.f32 %v76, -100.0
    %v79 = vsub.f32 1.0, %v63
    %v80 = vsub.f32 1.0, %v64
    %v81 = vlog2.pop %v79
    %v82 = vmul.f32 %v81, 0.6931472
    %v83 = vlog2.pop %v80
    %v84 = vmul.f32 %v83, 0.6931472
    %v85 = vmax.f32 %v82, -100.0
    %v86 = vmax.f32 %v84, -100.0
    %v87 = vsub.f32 %v77, %v85
    %v88 = vsub.f32 %v78, %v86
    %v89 = vmul.f32 %v65, %v87
    %v90 = vmul.f32 %v66, %v88
    %v91 = vadd.f32 %v89, %v85
    %v92 = vadd.f32 %v90, %v86
    %v93 = vld [vmem:[#allocation7] sm:$0xff]
    %v94 = vadd.f32 %v71, %v72
    %v95 = vadd.f32 %v93, %v94
    %96 = vst [vmem:[#allocation7] sm:$0xff] %v95
    %s97 = scalar_lea.vmem [#allocation7], 8
    %v98 = vld [vmem:[%s97] sm:$0xff]
    %v99 = vmul.f32 %v91, %v71
    %v100 = vmul.f32 %v92, %v72
    %v101 = vadd.f32 %v99, %v100
    %v102 = vadd.f32 %v98, %v101
    %103 = vst [vmem:[%s97] sm:$0xff] %v102
    %s104 = scalar_lea.vmem [#allocation7], 16
    %v105 = vld [vmem:[%s104] sm:$0xff]
    %v106 = vadd.f32 %v91, %v92
    %v107 = vadd.f32 %v105, %v106
    %108 = vst [vmem:[%s104] sm:$0xff] %v107
    // Predicated region
    $region22: #{tpu_custom_call.1} parent=1 // pred_check
      _
    $region23: #{tpu_custom_call.1} parent=1 // pred_check_branch
      %110 = sbr.rel (0) target = $region25
    $region24: #{tpu_custom_call.1} parent=1 // pred_region
      %112 = vsyncadd [#allocation4], 0
      %s113 = sshll.u32 [#allocation7], 4
      %s114 = int_to_ptr.vmem [resolvable:$true] %s113
      %s115 = sshll.u32 %s2, 4
      %s116 = int_to_ptr.hbm [resolvable:$true] %s115
      %121 = dma.vmem_to_hbm [thread:$0]  %s114, 384, %s116, [#allocation4], 128, 128, 8
    $region25: #{tpu_custom_call.1} parent=1 // pred_fallthru
      _
    // Predicated region
    $region26: #{tpu_custom_call.1} parent=1 // pred_check
      _
    $region27: #{tpu_custom_call.1} parent=1 // pred_check_branch
      %123 = sbr.rel (0) target = $region29
    $region28: #{tpu_custom_call.1} parent=1 // pred_region
      %125 = dma.done [#allocation4], 384
    $region29: #{tpu_custom_call.1} parent=1 // pred_fallthru
      _
    %126 = vsyncpa [#allocation3], 1
    %127 = vsyncpa [#allocation6], 1
    %128 = vsyncpa [#allocation4], 1

</llo_original>
